<compile_context>
chip_gen: v7x
topology: tpu7x:2x2x1
jax: 0.10.0
libtpu: 0.0.40
codegen_flags: <defaults>
</compile_context>

<pallas_src>
import jax
import jax.numpy as jnp
from jax.experimental import pallas as pl
from jax.experimental.pallas import tpu as pltpu


def _copy_kernel(x_ref, o_ref):
    # Whole-tile copy: load the current VMEM block and store it unchanged.
    o_ref[...] = x_ref[...]


_LANE_CANDIDATES = (16384, 8192, 4096, 2048, 1024, 512, 256, 128)
_MIN_PIPELINE_BYTES = 512 * 1024  # below this, a single block is fine
_MIN_GRID_STEPS = 4               # enough steps to overlap in/out DMAs


def _chip_config():
    """Return (target_block_bytes, vmem_limit_bytes_or_None, prefer_core_parallel)."""
    try:
        kind = jax.devices()[0].device_kind.lower()
    except Exception:  # pragma: no cover - defensive; fall back to conservative config
        kind = ""
    if "v7" in kind:
        # v7x: 64 MiB VMEM/TC -> cap blocks so 4 buffers stay ~20 MiB (< 32 MiB scoped).
        return 5 * 1024 * 1024, None, True
    if "v6" in kind:
        # v6e: 128 MiB physical VMEM -> bigger blocks + explicitly raised scoped limit.
        return 7 * 1024 * 1024, 48 * 1024 * 1024, False
    # v5e / unknown: 16 MiB scoped default -> ~2 MiB blocks, default double-buffering.
    return 2 * 1024 * 1024, None, False


def _choose_lanes(total, sublane, want_pipeline):
    """Largest lane width (multiple of 128) that divides `total` and leaves
    enough rows: prefer rows >= sublane*MIN_GRID_STEPS (pipelined grid), then
    rows >= sublane (full vreg), then anything."""
    prefs = [sublane, 1]
    if want_pipeline:
        prefs.insert(0, sublane * _MIN_GRID_STEPS)
    for min_rows in prefs:
        for lanes in _LANE_CANDIDATES:
            if total % lanes == 0 and total // lanes >= min_rows:
                return lanes
    return None


def _choose_tile_rows(rows, sublane, ideal, min_steps):
    """Pick a sublane-aligned row tile near `ideal`, honouring a minimum grid
    length and never collapsing to degenerately small tiles."""
    if min_steps > 1:
        cap = max(sublane, (rows // min_steps) // sublane * sublane)
        ideal = min(ideal, cap)
    ideal = max(sublane, ideal)
    if rows <= ideal:
        # Single block (only for small tensors): full row extent is always legal.
        return rows
    # Prefer an aligned exact divisor near the target, but floor the search at
    # ideal // 2 — a ragged masked tail at `ideal` beats tiny blocks.
    floor = max(sublane, (ideal // 2) // sublane * sublane)
    for c in range(ideal, floor - 1, -sublane):
        if rows % c == 0:
            return c
    return ideal  # ragged tail; Pallas masks the out-of-bounds writes


def cifar100net_forward(x: jax.Array, *, use_kernel: bool = True,
                        inplace: bool = False) -> jax.Array:
    """Identity forward pass of Cifar100Net.

    use_kernel=False returns x directly (the op is mathematically free; this is
    the fastest correct implementation).  With use_kernel=True the data is run
    through a lane-dense, double-buffered Pallas copy kernel.

    inplace=True adds input_output_aliases={0: 0}; pair it with
    jax.jit(..., donate_argnums=0) on the caller side, otherwise XLA inserts a
    defensive copy and the alias buys nothing.
    """
    if not use_kernel:
        return x

    orig_shape = x.shape
    orig_dtype = x.dtype

    # Empty tensor: nothing to copy, identity is exact.
    if x.size == 0:
        return x

    total = int(x.size)
    itemsize = jnp.dtype(orig_dtype).itemsize
    # Sublane alignment: 8 (f32), 16 (bf16/f16), 32 (int8/fp8).
    sublane = max(8, 32 // max(itemsize, 1))

    total_bytes = total * itemsize
    want_pipeline = total_bytes >= _MIN_PIPELINE_BYTES
    min_steps = _MIN_GRID_STEPS if want_pipeline else 1

    lanes = _choose_lanes(total, sublane, want_pipeline)
    if lanes is None:
        # Size not a multiple of 128 elements: the module is a pure identity,
        # so return x rather than emit masked, low-lane-utilisation stores.
        return x

    rows = total // lanes
    row_bytes = lanes * itemsize

    target_block_bytes, vmem_limit_bytes, prefer_core_parallel = _chip_config()
    ideal = max(sublane, (target_block_bytes // row_bytes) // sublane * sublane)
    tile_rows = _choose_tile_rows(rows, sublane, ideal, min_steps)

    num_steps = pl.cdiv(rows, tile_rows)
    grid = (num_steps,)
    x2 = x.reshape(rows, lanes)

    # Single grid axis, fully independent steps.  On v7x, CORE_PARALLEL shards
    # the copy across both TensorCores (each drives its own DMA stream) when
    # the grid is long enough; elsewhere plain "parallel" is a no-op-safe choice.
    core_parallel = getattr(pltpu, "CORE_PARALLEL", None)
    if prefer_core_parallel and core_parallel is not None and num_steps >= 4:
        dim_sems = (core_parallel,)
    else:
        dim_sems = ("parallel",)

    kwargs = {}
    if inplace:
        kwargs["input_output_aliases"] = {0: 0}

    out2 = pl.pallas_call(
        _copy_kernel,
        out_shape=jax.ShapeDtypeStruct((rows, lanes), orig_dtype),
        grid_spec=pltpu.PrefetchScalarGridSpec(
            num_scalar_prefetch=0,
            grid=grid,
            in_specs=[pl.BlockSpec((tile_rows, lanes), lambda i: (i, 0))],
            out_specs=pl.BlockSpec((tile_rows, lanes), lambda i: (i, 0)),
        ),
        compiler_params=pltpu.CompilerParams(
            dimension_semantics=dim_sems,
            vmem_limit_bytes=vmem_limit_bytes,
        ),
        # Purely memory-bound: read + write of every byte, zero flops.
        cost_estimate=pl.CostEstimate(
            flops=0, transcendentals=0, bytes_accessed=2 * total_bytes
        ),
        **kwargs,
    )(x2)

    return out2.reshape(orig_shape)


if __name__ == "__main__":
    key = jax.random.PRNGKey(0)

    # CIFAR-100-like input at small shape: batch=2, channels=4, spatial=16.
    x = jax.random.normal(key, (2, 4, 16, 16), dtype=jnp.float32)
    y = jax.block_until_ready(cifar100net_forward(x))
    assert y.shape == x.shape and y.dtype == x.dtype
    assert bool(jnp.all(y == x))

    # Second check exercises the multi-step (pipelined) grid path (~1 MiB).
    x2 = jax.random.normal(jax.random.PRNGKey(0), (2048, 128), dtype=jnp.float32)
    y2 = jax.block_until_ready(cifar100net_forward(x2))
    assert y2.shape == x2.shape and bool(jnp.all(y2 == x2))

    print("KERNEL_OK")
</pallas_src>

<mosaic_0001>
module attributes {stable_mosaic.version = 11 : i64} {
  func.func @_copy_kernel(%arg0: i32, %arg1: memref<8x256xf32, #tpu.memory_space<vmem>>, %arg2: memref<8x256xf32, #tpu.memory_space<vmem>>) attributes {dimension_semantics = [#tpu.dimension_semantics<parallel>], iteration_bounds = array<i64: 1>, scalar_prefetch = 0 : i64, scratch_operands = 0 : i64, tpu.core_type = #tpu.core_type<tc>, window_params = [{transform_indices = @transform_0, window_bounds = array<i64: 8, 256>}, {transform_indices = @transform_1, window_bounds = array<i64: 8, 256>}]} {
    %c0 = arith.constant 0 : index
    %c0_0 = arith.constant 0 : index
    %0 = vector.load %arg1[%c0, %c0_0] : memref<8x256xf32, #tpu.memory_space<vmem>>, vector<8x256xf32>
    %c0_1 = arith.constant 0 : index
    %c0_2 = arith.constant 0 : index
    %1 = vector.load %arg2[%c0_1, %c0_2] : memref<8x256xf32, #tpu.memory_space<vmem>>, vector<8x256xf32>
    tpu.vector_store %arg2[%c0_1, %c0_2], %0 {strides = array<i32>} : memref<8x256xf32, #tpu.memory_space<vmem>>, vector<8x256xf32>,
    return
  }
  func.func @transform_0(%arg0: i32) -> (i32, i32) {
    %c0_i32 = arith.constant 0 : i32
    %c0_i32_0 = arith.constant 0 : i32
    return %arg0, %c0_i32 : i32, i32
  }
  func.func @transform_1(%arg0: i32) -> (i32, i32) {
    %c0_i32 = arith.constant 0 : i32
    %c0_i32_0 = arith.constant 0 : i32
    return %arg0, %c0_i32 : i32, i32
  }
}

</mosaic_0001>

<llo_original>
// kernel: tpu_custom_call.1
$region0: #{tpu_custom_call.1}
  #allocation0 [shape = 'u32[]', space=smem, size = 0x4, offset = 0x4, fixed_abs, tag = 'smem constant byte address 0x4 - core index']
  #allocation1 [shape = 'u32[144,128]{1,0:T(1,128)}', space=vmem, size = 0x12000, scoped, tag = 'internal scratch']
  %s0 = inlined_call_operand.hbm [shape: f32[8,256], index: 0, kind: input, shape index: {}]
  %s1 = inlined_call_operand.hbm [shape: f32[8,256], index: 1, kind: output, shape index: {}]
  %s2 = sld [smem:[#allocation0]]
  $region18: #{tpu_custom_call.1} parent=0
    _
  %s4 = ssub.s32 1, %s2
  %s5 = scalar_select 0, %s4, %s2
  $region1: #{tpu_custom_call.1} parent=0
    #allocation2 [shape = 'u8[8192]{0}', space=vmem, size = 0x2000, scoped, tag = 'input window, operand 0, single buffered']
    #allocation3 [shape = 's32[1]{0}', space=sflag, size = 0x4, scoped, tag = 'scoped memory for tpu_custom_call.1']
    #allocation4 [shape = 's32[1]{0}', space=sflag, size = 0x4, scoped, tag = 'scoped memory for tpu_custom_call.1']
    #allocation5 [shape = 'u8[8192]{0}', space=vmem, size = 0x2000, scoped, tag = 'output window, operand 0, single buffered']
    %6 = vsyncpa [#allocation3], 0
    %7 = vsyncpa [#allocation4], 0
    // Predicated region
    $region2: #{tpu_custom_call.1} parent=1 // pred_check
      _
    $region3: #{tpu_custom_call.1} parent=1 // pred_check_branch
      %9 = sbr.rel (0) target = $region5
    $region4: #{tpu_custom_call.1} parent=1 // pred_region
      %s11 = ssub.s32 256, 256
      %12 = vsyncadd [#allocation3], %s11
      %s14 = sshll.u32 [#allocation2], 4
      %s15 = int_to_ptr.vmem [resolvable:$true] %s14
      %17 = dma.hbm_to_vmem [thread:$0]  %s0, 256, %s15, [#allocation3]
    $region5: #{tpu_custom_call.1} parent=1 // pred_fallthru
      _
    // Predicated region
    $region6: #{tpu_custom_call.1} parent=1 // pred_check
      _
    $region7: #{tpu_custom_call.1} parent=1 // pred_check_branch
      %19 = sbr.rel (0) target = $region9
    $region8: #{tpu_custom_call.1} parent=1 // pred_region
      %20 = dma.done [#allocation3], 256
    $region9: #{tpu_custom_call.1} parent=1 // pred_fallthru
      _
    %v21 = vld [vmem:[#allocation2] sm:$0xff]
    %v22 = vld [vmem:[#allocation2 + $0x8] sm:$0xff]
    %23 = vst [vmem:[#allocation5] sm:$0xff] %v21
    %24 = vst [vmem:[#allocation5 + $0x8] sm:$0xff] %v22
    // Predicated region
    $region10: #{tpu_custom_call.1} parent=1 // pred_check
      _
    $region11: #{tpu_custom_call.1} parent=1 // pred_check_branch
      %26 = sbr.rel (0) target = $region13
    $region12: #{tpu_custom_call.1} parent=1 // pred_region
      %s28 = ssub.s32 256, 256
      %29 = vsyncadd [#allocation4], %s28
      %s31 = sshll.u32 [#allocation5], 4
      %s32 = int_to_ptr.vmem [resolvable:$true] %s31
      %34 = dma.vmem_to_hbm [thread:$0]  %s32, 256, %s1, [#allocation4]
    $region13: #{tpu_custom_call.1} parent=1 // pred_fallthru
      _
    // Predicated region
    $region14: #{tpu_custom_call.1} parent=1 // pred_check
      _
    $region15: #{tpu_custom_call.1} parent=1 // pred_check_branch
      %36 = sbr.rel (0) target = $region17
    $region16: #{tpu_custom_call.1} parent=1 // pred_region
      %37 = dma.done [#allocation4], 256
    $region17: #{tpu_custom_call.1} parent=1 // pred_fallthru
      _
    %38 = vsyncpa [#allocation3], 1
    %39 = vsyncpa [#allocation4], 1

</llo_original>
